<compile_context>
chip_gen: v7x
topology: tpu7x:2x2x1
jax: 0.10.0
libtpu: 0.0.40
codegen_flags: <defaults>
</compile_context>

<pallas_src>
import functools
import math

import jax
import jax.numpy as jnp
from jax.experimental import pallas as pl
from jax.experimental.pallas import tpu as pltpu

LANE = 128          # lane width (last dim alignment)
SUBLANE = 8         # f32 sublane count (second-last dim alignment)
WEIGHT_DTYPE = jnp.bfloat16   # weights (f32 accumulation via MXU)
ACT_DTYPE = jnp.bfloat16      # HBM intermediates: gates_x, inter-layer out_seq
GATE_PERM = (0, 1, 3, 2)      # PyTorch [i, f, g, o] -> kernel [i, f, o, g]


def _round_up(x, m):
    return ((x + m - 1) // m) * m


# ----------------------------------------------------------------------------
# VMEM limit / single-buffering helpers
# ----------------------------------------------------------------------------
def _vmem_limit_bytes():
    """Explicit scoped-VMEM limit: ~100 MiB on 128 MiB chips (v5e/v6e),
    ~48 MiB fallback / 3/4 of capacity on smaller-VMEM chips (v7x)."""
    try:
        cap = int(pltpu.get_tpu_info().vmem_capacity_bytes)
        return int(min(100 * 1024 * 1024, cap * 3 // 4))
    except Exception:
        return 48 * 1024 * 1024


_BUFFERED_ONE = None   # cached: pl.Buffered(1) if supported, else False


def _single_buffer_mode():
    """pl.Buffered(1) for grid-invariant operands (weights / biases / initial
    state) so they are not double-buffered; graceful fallback if unsupported."""
    global _BUFFERED_ONE
    if _BUFFERED_ONE is None:
        try:
            def _probe(x_ref, o_ref):
                o_ref[...] = x_ref[...]

            pl.pallas_call(
                _probe,
                out_shape=jax.ShapeDtypeStruct((SUBLANE, LANE), jnp.float32),
                grid=(2,),
                in_specs=[pl.BlockSpec((SUBLANE, LANE), lambda i: (0, 0),
                                       pipeline_mode=pl.Buffered(buffer_count=1))],
                out_specs=pl.BlockSpec((SUBLANE, LANE), lambda i: (0, 0)),
            )(jnp.zeros((SUBLANE, LANE), jnp.float32))
            _BUFFERED_ONE = pl.Buffered(buffer_count=1)
        except Exception:
            _BUFFERED_ONE = False
    return _BUFFERED_ONE if _BUFFERED_ONE is not False else None


def _const_spec(shape):
    """BlockSpec for a grid-invariant operand (constant index map),
    single-buffered when the installed Pallas supports pipeline_mode."""
    n = len(shape)
    index_map = lambda t, _n=n: (0,) * _n
    mode = _single_buffer_mode()
    if mode is None:
        return pl.BlockSpec(shape, index_map)
    return pl.BlockSpec(shape, index_map, pipeline_mode=mode)


def _pick_time_chunk(T, Bp, G, cap=64, budget_bytes=4 * 1024 * 1024):
    """Time-chunk: amortize ~0.35us/grid-step overhead while keeping the
    (Tc, Bp, 4Hp) bf16 gates chunk (double-buffered) inside a VMEM budget."""
    per_step = 2 * Bp * G * jnp.dtype(ACT_DTYPE).itemsize
    tc = max(1, min(cap, budget_bytes // max(per_step, 1)))
    return int(min(tc, max(T, 1)))


# ----------------------------------------------------------------------------
# Pallas kernel 1: hoisted input projection  gates_x = x @ W_ih + bias  (bf16)
# Big (Tc*Bp, D) x (D, 4Hp) matmul per grid step, megacore-shardable.
# ----------------------------------------------------------------------------
def input_proj_kernel(x_ref, w_ref, b_ref, o_ref):
    x = x_ref[...].astype(w_ref.dtype)
    acc = jnp.dot(x, w_ref[...], preferred_element_type=jnp.float32)
    o_ref[...] = (acc + b_ref[...]).astype(o_ref.dtype)


def input_projection(x, w_ih, bias, Tc):
    """x: (Tp, Bp, D) -> gates_x: (Tp, Bp, 4Hp) in bf16."""
    Tp, Bp, D = x.shape
    G = w_ih.shape[1]                      # 4 * Hp
    rows = Tc * Bp
    x_flat = x.reshape(Tp * Bp, D)

    gates = pl.pallas_call(
        input_proj_kernel,
        out_shape=jax.ShapeDtypeStruct((Tp * Bp, G), ACT_DTYPE),
        grid_spec=pltpu.PrefetchScalarGridSpec(
            num_scalar_prefetch=0,
            grid=(Tp // Tc,),
            in_specs=[
                pl.BlockSpec((rows, D), lambda i: (i, 0)),
                _const_spec((D, G)),        # W_ih (bf16), single-buffered
                _const_spec((1, G)),        # fused bias (f32), single-buffered
            ],
            out_specs=pl.BlockSpec((rows, G), lambda i: (i, 0)),
        ),
        compiler_params=pltpu.CompilerParams(
            dimension_semantics=("parallel",),
            vmem_limit_bytes=_vmem_limit_bytes()),
    )(x_flat, w_ih, bias)
    return gates.reshape(Tp, Bp, G)


# ----------------------------------------------------------------------------
# Pallas kernel 2: time-serial recurrence (chunked), optional fused head.
# Grid iterates over time chunks ("arbitrary"); (h, c) carried in vregs within
# a chunk, flushed to f32 VMEM scratch once per chunk.
# ----------------------------------------------------------------------------
def _recurrence_steps(gx_ref, whh_ref, h0, c0, valid_steps, out_ref=None):
    """Run Tc LSTM steps with (h, c) carried as loop values.  Steps with
    s >= valid_steps (time padding of the last chunk) leave state unchanged."""
    Tc = gx_ref.shape[0]
    Hp = h0.shape[-1]

    def step(s, carry):
        h, c = carry
        # single per-step matmul: h @ W_hh (x-projection already hoisted)
        gates = gx_ref[s].astype(jnp.float32) + jnp.dot(
            h.astype(whh_ref.dtype), whh_ref[...],
            preferred_element_type=jnp.float32)
        # gate order [i, f, o, g]: one contiguous sigmoid slab + trailing tanh
        sig = jax.nn.sigmoid(gates[:, 0 * Hp:3 * Hp])
        i_g = sig[:, 0 * Hp:1 * Hp]
        f_g = sig[:, 1 * Hp:2 * Hp]
        o_g = sig[:, 2 * Hp:3 * Hp]
        g_g = jnp.tanh(gates[:, 3 * Hp:4 * Hp])
        c_new = f_g * c + i_g * g_g
        h_new = o_g * jnp.tanh(c_new)
        keep = s < valid_steps
        h_next = jnp.where(keep, h_new, h)
        c_next = jnp.where(keep, c_new, c)
        if out_ref is not None:
            out_ref[s] = h_next.astype(out_ref.dtype)
        return (h_next, c_next)

    return jax.lax.fori_loop(0, Tc, step, (h0, c0), unroll=True)


def lstm_rec_kernel(gx_ref, h0_ref, c0_ref, whh_ref,
                    out_ref, hf_ref, cf_ref, h_sc, c_sc, *, seq_len):
    t = pl.program_id(0)
    Tc = gx_ref.shape[0]

    @pl.when(t == 0)
    def _():
        h_sc[...] = h0_ref[...]
        c_sc[...] = c0_ref[...]

    valid = jnp.minimum(Tc, seq_len - t * Tc)
    h, c = _recurrence_steps(gx_ref, whh_ref, h_sc[...], c_sc[...],
                             valid, out_ref)
    h_sc[...] = h
    c_sc[...] = c

    @pl.when(t == pl.num_programs(0) - 1)
    def _():
        hf_ref[...] = h
        cf_ref[...] = c


def lstm_rec_top_kernel(gx_ref, h0_ref, c0_ref, whh_ref, wout_ref, bout_ref,
                        head_ref, hf_ref, cf_ref, h_sc, c_sc, *, seq_len):
    t = pl.program_id(0)
    Tc = gx_ref.shape[0]

    @pl.when(t == 0)
    def _():
        h_sc[...] = h0_ref[...]
        c_sc[...] = c0_ref[...]
        head_ref[...] = jnp.zeros_like(head_ref)   # robustness vs. revisits

    valid = jnp.minimum(Tc, seq_len - t * Tc)
    # top layer: no (Tp, Bp, Hp) out_seq HBM writeback (only last h is used)
    h, c = _recurrence_steps(gx_ref, whh_ref, h_sc[...], c_sc[...],
                             valid, out_ref=None)
    h_sc[...] = h
    c_sc[...] = c

    @pl.when(t == pl.num_programs(0) - 1)
    def _():
        hf_ref[...] = h
        cf_ref[...] = c
        logits = jnp.dot(h.astype(wout_ref.dtype), wout_ref[...],
                         preferred_element_type=jnp.float32) + bout_ref[...]
        head_ref[...] = jax.nn.sigmoid(logits)


def lstm_layer(gx, h0, c0, w_hh, Tc, seq_len):
    """gates_x: (Tp, Bp, 4Hp) bf16. Returns (out_seq bf16, h_T f32, c_T f32)."""
    Tp, Bp, G = gx.shape
    Hp = h0.shape[1]
    out_shapes = (
        jax.ShapeDtypeStruct((Tp, Bp, Hp), ACT_DTYPE),     # inter-layer acts
        jax.ShapeDtypeStruct((Bp, Hp), jnp.float32),
        jax.ShapeDtypeStruct((Bp, Hp), jnp.float32),
    )
    grid_spec = pltpu.PrefetchScalarGridSpec(
        num_scalar_prefetch=0,
        grid=(Tp // Tc,),
        in_specs=[
            pl.BlockSpec((Tc, Bp, G), lambda t: (t, 0, 0)),   # gates_x chunk
            _const_spec((Bp, Hp)),                            # h0
            _const_spec((Bp, Hp)),                            # c0
            _const_spec((Hp, G)),                             # W_hh (bf16)
        ],
        out_specs=[
            pl.BlockSpec((Tc, Bp, Hp), lambda t: (t, 0, 0)),  # out_seq chunk
            pl.BlockSpec((Bp, Hp), lambda t: (0, 0)),         # h_T
            pl.BlockSpec((Bp, Hp), lambda t: (0, 0)),         # c_T
        ],
        scratch_shapes=[pltpu.VMEM((Bp, Hp), jnp.float32),
                        pltpu.VMEM((Bp, Hp), jnp.float32)],
    )
    return pl.pallas_call(
        functools.partial(lstm_rec_kernel, seq_len=seq_len),
        out_shape=out_shapes,
        grid_spec=grid_spec,
        compiler_params=pltpu.CompilerParams(
            dimension_semantics=("arbitrary",),
            vmem_limit_bytes=_vmem_limit_bytes()),
    )(gx, h0, c0, w_hh)


def lstm_layer_top(gx, h0, c0, w_hh, w_out, b_out, Tc, seq_len):
    """Top layer with fused linear + sigmoid head on the last timestep."""
    Tp, Bp, G = gx.shape
    Hp = h0.shape[1]
    OP = w_out.shape[1]
    out_shapes = (
        jax.ShapeDtypeStruct((Bp, OP), jnp.float32),   # head: sigmoid(linear)
        jax.ShapeDtypeStruct((Bp, Hp), jnp.float32),   # h_T
        jax.ShapeDtypeStruct((Bp, Hp), jnp.float32),   # c_T
    )
    grid_spec = pltpu.PrefetchScalarGridSpec(
        num_scalar_prefetch=0,
        grid=(Tp // Tc,),
        in_specs=[
            pl.BlockSpec((Tc, Bp, G), lambda t: (t, 0, 0)),
            _const_spec((Bp, Hp)),
            _const_spec((Bp, Hp)),
            _const_spec((Hp, G)),
            _const_spec((Hp, OP)),
            _const_spec((1, OP)),
        ],
        out_specs=[
            pl.BlockSpec((Bp, OP), lambda t: (0, 0)),
            pl.BlockSpec((Bp, Hp), lambda t: (0, 0)),
            pl.BlockSpec((Bp, Hp), lambda t: (0, 0)),
        ],
        scratch_shapes=[pltpu.VMEM((Bp, Hp), jnp.float32),
                        pltpu.VMEM((Bp, Hp), jnp.float32)],
    )
    return pl.pallas_call(
        functools.partial(lstm_rec_top_kernel, seq_len=seq_len),
        out_shape=out_shapes,
        grid_spec=grid_spec,
        compiler_params=pltpu.CompilerParams(
            dimension_semantics=("arbitrary",),
            vmem_limit_bytes=_vmem_limit_bytes()),
    )(gx, h0, c0, w_hh, w_out, b_out)


# ----------------------------------------------------------------------------
# Parameters (PyTorch-style init; pre-transposed, gate-permuted, zero-padded)
# ----------------------------------------------------------------------------
def _pad_gate_cols(w_t, H, Hp):
    """Permute the trailing 4H gate axis [i,f,g,o]->[i,f,o,g] and pad each
    gate H -> Hp independently (trailing axis becomes 4Hp)."""
    lead = w_t.shape[:-1]
    w4 = w_t.reshape(lead + (4, H))
    w4 = w4[..., GATE_PERM, :]
    pad = [(0, 0)] * len(lead) + [(0, 0), (0, Hp - H)]
    return jnp.pad(w4, pad).reshape(lead + (4 * Hp,))


def init_params(key, no_layers, vocab_size, embedding_dim, hidden_dim, out_dim=3):
    H = hidden_dim
    Hp = _round_up(H, LANE)
    OP = _round_up(out_dim, LANE)
    keys = jax.random.split(key, 3 + 4 * no_layers)

    # Embedding (PyTorch: N(0,1), padding_idx=0 row zeroed).
    emb = jax.random.normal(keys[0], (vocab_size, embedding_dim), jnp.float32)
    emb = emb.at[0].set(0.0)

    # LSTM layers (PyTorch: U(-k, k), k = 1/sqrt(hidden_dim)).
    k = 1.0 / math.sqrt(H)
    layers = []
    for l in range(no_layers):
        in_dim = embedding_dim if l == 0 else H
        in_pad = embedding_dim if l == 0 else Hp
        k0, k1, k2, k3 = keys[3 + 4 * l: 7 + 4 * l]
        w_ih = jax.random.uniform(k0, (4 * H, in_dim), jnp.float32, -k, k)
        w_hh = jax.random.uniform(k1, (4 * H, H), jnp.float32, -k, k)
        b_ih = jax.random.uniform(k2, (4 * H,), jnp.float32, -k, k)
        b_hh = jax.random.uniform(k3, (4 * H,), jnp.float32, -k, k)

        w_ih_p = _pad_gate_cols(jnp.transpose(w_ih), H, Hp)       # (in_dim, 4Hp)
        w_ih_p = jnp.pad(w_ih_p, ((0, in_pad - in_dim), (0, 0)))  # (in_pad, 4Hp)
        w_hh_p = _pad_gate_cols(jnp.transpose(w_hh), H, Hp)       # (H, 4Hp)
        w_hh_p = jnp.pad(w_hh_p, ((0, Hp - H), (0, 0)))           # (Hp, 4Hp)
        bias_p = _pad_gate_cols(b_ih + b_hh, H, Hp).reshape(1, 4 * Hp)

        layers.append({
            "w_ih": w_ih_p.astype(WEIGHT_DTYPE),
            "w_hh": w_hh_p.astype(WEIGHT_DTYPE),
            "bias": bias_p,                                       # f32
        })

    # Linear head (PyTorch: U(-k, k), k = 1/sqrt(hidden_dim)).
    w = jax.random.uniform(keys[1], (out_dim, H), jnp.float32, -k, k)
    b = jax.random.uniform(keys[2], (out_dim,), jnp.float32, -k, k)
    w_p = jnp.pad(jnp.transpose(w), ((0, Hp - H), (0, OP - out_dim)))
    b_p = jnp.pad(b, (0, OP - out_dim)).reshape(1, OP)

    params = {
        "embedding": emb,
        "lstm": layers,
        "linear_w": w_p.astype(WEIGHT_DTYPE),
        "linear_b": b_p,
    }
    meta = {"hidden_dim": H, "hidden_pad": Hp,
            "out_dim": out_dim, "out_pad": OP, "no_layers": no_layers}
    return params, meta


# ----------------------------------------------------------------------------
# Forward
# ----------------------------------------------------------------------------
def lstm_forward(params, meta, tokens, hidden_state):
    """tokens: (B, T) int32, hidden_state: (h0, c0) each (no_layers, B, H)."""
    h0_all, c0_all = hidden_state
    L, B, H = h0_all.shape
    T = tokens.shape[1]
    Hp = meta["hidden_pad"]
    out_dim = meta["out_dim"]
    Bp = _round_up(max(B, SUBLANE), SUBLANE)
    G = 4 * Hp

    Tc = _pick_time_chunk(T, Bp, G)
    Tp = _round_up(T, Tc)                   # padded time; remainder masked

    # Embedding gather + time-major + batch/time zero-padding (plain-JAX glue).
    # TODO(synk): token-gather stays an XLA gather; a Pallas DMA-gather buys
    # nothing at these shapes.
    x = jnp.transpose(params["embedding"][tokens], (1, 0, 2))     # (T, B, E)
    x = jnp.pad(x, ((0, Tp - T), (0, Bp - B), (0, 0)))            # (Tp, Bp, E)

    h0p = jnp.pad(h0_all, ((0, 0), (0, Bp - B), (0, Hp - H)))
    c0p = jnp.pad(c0_all, ((0, 0), (0, Bp - B), (0, Hp - H)))

    h_fs, c_fs = [], []
    head = None
    for l in range(L):
        lp = params["lstm"][l]
        gx = input_projection(x, lp["w_ih"], lp["bias"], Tc)      # (Tp,Bp,4Hp) bf16
        if l == L - 1:
            head, h_f, c_f = lstm_layer_top(
                gx, h0p[l], c0p[l], lp["w_hh"],
                params["linear_w"], params["linear_b"], Tc, T)
        else:
            x, h_f, c_f = lstm_layer(gx, h0p[l], c0p[l], lp["w_hh"], Tc, T)
        h_fs.append(h_f)
        c_fs.append(c_f)

    h_n = jnp.stack(h_fs, axis=0)[:, :B, :H]
    c_n = jnp.stack(c_fs, axis=0)[:, :B, :H]
    out = head[:B, :out_dim]
    return out, (h_n, c_n)


if __name__ == "__main__":
    no_layers = 2
    vocab_size = 32
    embedding_dim = 16
    hidden_dim = 32
    batch = 2
    seq = 8

    key = jax.random.PRNGKey(0)
    pkey, tkey = jax.random.split(key)

    params, meta = init_params(pkey, no_layers, vocab_size,
                               embedding_dim, hidden_dim)

    tokens = jax.random.randint(tkey, (batch, seq), 0, vocab_size,
                                dtype=jnp.int32)
    h0 = jnp.zeros((no_layers, batch, hidden_dim), jnp.float32)
    c0 = jnp.zeros((no_layers, batch, hidden_dim), jnp.float32)

    out, (h_n, c_n) = lstm_forward(params, meta, tokens, (h0, c0))
    jax.block_until_ready((out, h_n, c_n))

    assert out.shape == (batch, 3)
    assert h_n.shape == (no_layers, batch, hidden_dim)
    assert c_n.shape == (no_layers, batch, hidden_dim)
    assert bool(jnp.all(jnp.isfinite(out)))
    assert bool(jnp.all((out >= 0.0) & (out <= 1.0)))
    print("KERNEL_OK")
</pallas_src>

<mosaic_0001>
module attributes {stable_mosaic.version = 11 : i64} {
  func.func @_probe(%arg0: i32, %arg1: memref<8x128xf32, #tpu.memory_space<vmem>>, %arg2: memref<8x128xf32, #tpu.memory_space<vmem>>) attributes {dimension_semantics = [#tpu.dimension_semantics<arbitrary>], iteration_bounds = array<i64: 2>, scalar_prefetch = 0 : i64, scratch_operands = 0 : i64, tpu.core_type = #tpu.core_type<tc>, window_params = [{pipeline_mode = #tpu.pipeline_mode<synchronous>, transform_indices = @transform_0, window_bounds = array<i64: 8, 128>}, {pipeline_mode = #tpu.pipeline_mode<synchronous>, transform_indices = @transform_1, window_bounds = array<i64: 8, 128>}]} {
    %c0 = arith.constant 0 : index
    %c0_0 = arith.constant 0 : index
    %0 = vector.load %arg1[%c0, %c0_0] : memref<8x128xf32, #tpu.memory_space<vmem>>, vector<8x128xf32>
    %c0_1 = arith.constant 0 : index
    %c0_2 = arith.constant 0 : index
    %1 = vector.load %arg2[%c0_1, %c0_2] : memref<8x128xf32, #tpu.memory_space<vmem>>, vector<8x128xf32>
    tpu.vector_store %arg2[%c0_1, %c0_2], %0 {strides = array<i32>} : memref<8x128xf32, #tpu.memory_space<vmem>>, vector<8x128xf32>,
    return
  }
  func.func @transform_0(%arg0: i32) -> (i32, i32) {
    %c0_i32 = arith.constant 0 : i32
    %c0_i32_0 = arith.constant 0 : i32
    %c0_i32_1 = arith.constant 0 : i32
    return %c0_i32, %c0_i32_0 : i32, i32
  }
  func.func @transform_1(%arg0: i32) -> (i32, i32) {
    %c0_i32 = arith.constant 0 : i32
    %c0_i32_0 = arith.constant 0 : i32
    %c0_i32_1 = arith.constant 0 : i32
    return %c0_i32, %c0_i32_0 : i32, i32
  }
}

module attributes {stable_mosaic.version = 11 : i64} {
  func.func @input_proj_kernel(%arg0: i32, %arg1: memref<64x16xf32, #tpu.memory_space<vmem>>, %arg2: memref<16x512xbf16, #tpu.memory_space<vmem>>, %arg3: memref<1x512xf32, #tpu.memory_space<vmem>>, %arg4: memref<64x512xbf16, #tpu.memory_space<vmem>>) attributes {dimension_semantics = [#tpu.dimension_semantics<parallel>], iteration_bounds = array<i64: 1>, scalar_prefetch = 0 : i64, scratch_operands = 0 : i64, tpu.core_type = #tpu.core_type<tc>, window_params = [{transform_indices = @transform_0, window_bounds = array<i64: 64, 16>}, {pipeline_mode = #tpu.pipeline_mode<synchronous>, transform_indices = @transform_1, window_bounds = array<i64: 16, 512>}, {pipeline_mode = #tpu.pipeline_mode<synchronous>, transform_indices = @transform_2, window_bounds = array<i64: 1, 512>}, {transform_indices = @transform_3, window_bounds = array<i64: 64, 512>}]} {
    %c0 = arith.constant 0 : index
    %c0_0 = arith.constant 0 : index
    %0 = vector.load %arg1[%c0, %c0_0] : memref<64x16xf32, #tpu.memory_space<vmem>>, vector<64x16xf32>
    %1 = arith.truncf %0 : vector<64x16xf32> to vector<64x16xbf16>
    %c0_1 = arith.constant 0 : index
    %c0_2 = arith.constant 0 : index
    %2 = vector.load %arg2[%c0_1, %c0_2] : memref<16x512xbf16, #tpu.memory_space<vmem>>, vector<16x512xbf16>
    %cst = arith.constant dense<0.000000e+00> : vector<64x512xf32>
    %3 = tpu.matmul %1, %2, %cst {dimension_numbers = #tpu.dot_dimension_numbers<[1], [0], [0], [1], [0, 0, 1, 1], [], []>} : vector<64x16xbf16>, vector<16x512xbf16>, vector<64x512xf32> -> vector<64x512xf32>
    %c0_3 = arith.constant 0 : index
    %c0_4 = arith.constant 0 : index
    %4 = vector.load %arg3[%c0_3, %c0_4] : memref<1x512xf32, #tpu.memory_space<vmem>>, vector<1x512xf32>
    %5 = vector.broadcast %4 : vector<1x512xf32> to vector<64x512xf32>
    %6 = arith.addf %3, %5 : vector<64x512xf32>
    %7 = arith.truncf %6 : vector<64x512xf32> to vector<64x512xbf16>
    %c0_5 = arith.constant 0 : index
    %c0_6 = arith.constant 0 : index
    %8 = vector.load %arg4[%c0_5, %c0_6] : memref<64x512xbf16, #tpu.memory_space<vmem>>, vector<64x512xbf16>
    tpu.vector_store %arg4[%c0_5, %c0_6], %7 {strides = array<i32>} : memref<64x512xbf16, #tpu.memory_space<vmem>>, vector<64x512xbf16>,
    return
  }
  func.func @transform_0(%arg0: i32) -> (i32, i32) {
    %c0_i32 = arith.constant 0 : i32
    %c0_i32_0 = arith.constant 0 : i32
    return %arg0, %c0_i32 : i32, i32
  }
  func.func @transform_1(%arg0: i32) -> (i32, i32) {
    %c0_i32 = arith.constant 0 : i32
    %c0_i32_0 = arith.constant 0 : i32
    %c0_i32_1 = arith.constant 0 : i32
    return %c0_i32, %c0_i32_0 : i32, i32
  }
  func.func @transform_2(%arg0: i32) -> (i32, i32) {
    %c0_i32 = arith.constant 0 : i32
    %c0_i32_0 = arith.constant 0 : i32
    %c0_i32_1 = arith.constant 0 : i32
    return %c0_i32, %c0_i32_0 : i32, i32
  }
  func.func @transform_3(%arg0: i32) -> (i32, i32) {
    %c0_i32 = arith.constant 0 : i32
    %c0_i32_0 = arith.constant 0 : i32
    return %arg0, %c0_i32 : i32, i32
  }
}

</mosaic_0001>

<llo_original>
// kernel: tpu_custom_call.1
$region0: #{tpu_custom_call.1}
  #allocation0 [shape = 'u32[]', space=smem, size = 0x4, offset = 0x4, fixed_abs, tag = 'smem constant byte address 0x4 - core index']
  #allocation1 [shape = 'u32[144,128]{1,0:T(1,128)}', space=vmem, size = 0x12000, scoped, tag = 'internal scratch']
  %s0 = inlined_call_operand.hbm [shape: f32[8,128], index: 0, kind: input, shape index: {}]
  %s1 = inlined_call_operand.hbm [shape: f32[8,128], index: 1, kind: output, shape index: {}]
  %s2 = sld [smem:[#allocation0]]
  $region41: #{tpu_custom_call.1} parent=0
    _
  %s4 = ssub.s32 1, %s2
  %s5 = scalar_select 0, %s4, %s2
  $region1: #{tpu_custom_call.1} parent=0
    #allocation2 [shape = 'u8[4096]{0}', space=vmem, size = 0x1000, scoped, tag = 'input window, operand 0, single buffered']
    #allocation3 [shape = 's32[2]{0}', space=sflag, size = 0x8, scoped, tag = 'scoped memory for tpu_custom_call.1']
    #allocation4 [shape = 's32[2]{0}', space=sflag, size = 0x8, scoped, tag = 'scoped memory for tpu_custom_call.1']
    #allocation5 [shape = 'u8[4096]{0}', space=vmem, size = 0x1000, scoped, tag = 'output window, operand 0, single buffered']
    %6 = vsyncpa [#allocation3], 0
    %7 = vsyncpa [#allocation4], 0
    loop: start=0, step=1, limit=4
    $region2: #{tpu_custom_call.1} parent=1 // loop_pre_header
      _
    $region3: #{tpu_custom_call.1} parent=1 // loop_header
      %s9 = sphi 0, %s13
      %p10 = scmp.ge.s32.totalorder %s9, 4
      %s17 = sphi 0, %s17
      %s19 = sphi 0, %s17
      %s20 = sphi 0, %s19
      %s34 = sphi 0, %s20
      %s38 = sphi 0, %s38
      %s40 = sphi 0, %s38
      %s41 = sphi 0, %s40
      %s55 = sphi 0, %s41
    $region4: #{tpu_custom_call.1} parent=1 // loop_header_branch
      %12 = sbr.rel (%p10) target = $region8
    $region5: #{tpu_custom_call.1} parent=1 // loop_body
      %s14 = ssub.s32 %s9, 1
      %s15 = ssub.s32 %s9, 2
      %s16 = sadd.s32 %s9, 1
      %s18 = sadd.s32 %s17, 1
      %p21 = scmp.eq.s32.totalorder %s9, 1
      %p22 = scmp.ne.s32.totalorder %s17, %s19
      %p23 = scmp.eq.s32.totalorder %s9, 0
      %p24 = por %p22, %p23
      %p25 = scmp.ne.s32.totalorder %s17, %s19
      %p26 = scmp.eq.s32.totalorder %s14, 1
      %p27 = por %p25, %p26
      %p28 = scmp.ne.s32.totalorder %s19, %s20
      %p29 = scmp.eq.s32.totalorder %s14, 0
      %p30 = por %p28, %p29
      %p31 = scmp.ne.s32.totalorder %s19, %s20
      %p32 = scmp.eq.s32.totalorder %s15, 1
      %p33 = por %p31, %p32
      %p35 = scmp.ne.s32.totalorder %s20, %s34
      %p36 = scmp.eq.s32.totalorder %s15, 0
      %p37 = por %p35, %p36
      %s39 = sadd.s32 %s38, 1
      %p42 = scmp.eq.s32.totalorder %s9, 1
      %p43 = scmp.ne.s32.totalorder %s38, %s40
      %p44 = scmp.eq.s32.totalorder %s9, 0
      %p45 = por %p43, %p44
      %p46 = scmp.ne.s32.totalorder %s38, %s40
      %p47 = scmp.eq.s32.totalorder %s14, 1
      %p48 = por %p46, %p47
      %p49 = scmp.ne.s32.totalorder %s40, %s41
      %p50 = scmp.eq.s32.totalorder %s14, 0
      %p51 = por %p49, %p50
      %p52 = scmp.ne.s32.totalorder %s40, %s41
      %p53 = scmp.eq.s32.totalorder %s15, 1
      %p54 = por %p52, %p53
      %p56 = scmp.ne.s32.totalorder %s41, %s55
      %p57 = scmp.eq.s32.totalorder %s15, 0
      %p58 = por %p56, %p57
      %p59 = scmp.le.s32.totalorder 1, %s9
      %p60 = scmp.lt.s32.totalorder %s9, 3
      %p61 = pnand %p59, %p60
      %p62 = pneg %p61
      // Predicated region
      $region9: #{tpu_custom_call.1} parent=5 // pred_check
        _
      $region10: #{tpu_custom_call.1} parent=5 // pred_check_branch
        %64 = sbr.rel (%p61) target = $region12
      $region11: #{tpu_custom_call.1} parent=5 // pred_region
        %s65 = ssub.s32 %s9, 1
        // Predicated region
        $region13: #{tpu_custom_call.1} parent=11 // pred_check
          %p66 = pneg %p30
        $region14: #{tpu_custom_call.1} parent=11 // pred_check_branch
          %68 = sbr.rel (%p66) target = $region16
        $region15: #{tpu_custom_call.1} parent=11 // pred_region
          %s70 = ssub.s32 128, 128
          %71 = vsyncadd [#allocation3], %s70
          %s73 = sshll.u32 [#allocation2], 4
          %s74 = int_to_ptr.vmem [resolvable:$true] %s73
          %76 = dma.hbm_to_vmem [thread:$0]  %s0, 128, %s74, [#allocation3]
        $region16: #{tpu_custom_call.1} parent=11 // pred_fallthru
          _
      $region12: #{tpu_custom_call.1} parent=5 // pred_fallthru
        _
      %p77 = scmp.lt.s32.totalorder %s9, 2
      // Predicated region
      $region17: #{tpu_custom_call.1} parent=5 // pred_check
        %p78 = pneg %p77
      $region18: #{tpu_custom_call.1} parent=5 // pred_check_branch
        %80 = sbr.rel (%p78) target = $region20
      $region19: #{tpu_custom_call.1} parent=5 // pred_region
        _
      $region20: #{tpu_custom_call.1} parent=5 // pred_fallthru
        _
      %p81 = scmp.le.s32.totalorder 1, %s9
      %p82 = scmp.lt.s32.totalorder %s9, 3
      %p83 = pnand %p81, %p82
      %p84 = pneg %p83
      // Predicated region
      $region21: #{tpu_custom_call.1} parent=5 // pred_check
        _
      $region22: #{tpu_custom_call.1} parent=5 // pred_check_branch
        %86 = sbr.rel (%p83) target = $region24
      $region23: #{tpu_custom_call.1} parent=5 // pred_region
        %s87 = ssub.s32 %s9, 1
        // Predicated region
        $region25: #{tpu_custom_call.1} parent=23 // pred_check
          %p88 = pneg %p30
        $region26: #{tpu_custom_call.1} parent=23 // pred_check_branch
          %90 = sbr.rel (%p88) target = $region28
        $region27: #{tpu_custom_call.1} parent=23 // pred_region
          %91 = dma.done [#allocation3], 128
        $region28: #{tpu_custom_call.1} parent=23 // pred_fallthru
          _
        %p92 = pneg %p30
        %p93 = pneg %p27
        %p94 = pneg %p51
        %p95 = pneg %p48
        %v96 = vld [vmem:[#allocation2] sm:$0xff]
        %97 = vst [vmem:[#allocation5] sm:$0xff] %v96
        // Predicated region
        $region29: #{tpu_custom_call.1} parent=23 // pred_check
          %p98 = pneg %p48
        $region30: #{tpu_custom_call.1} parent=23 // pred_check_branch
          %100 = sbr.rel (%p98) target = $region32
        $region31: #{tpu_custom_call.1} parent=23 // pred_region
          %s102 = ssub.s32 128, 128
          %103 = vsyncadd [#allocation4], %s102
          %s105 = sshll.u32 [#allocation5], 4
          %s106 = int_to_ptr.vmem [resolvable:$true] %s105
          %108 = dma.vmem_to_hbm [thread:$0]  %s106, 128, %s1, [#allocation4]
        $region32: #{tpu_custom_call.1} parent=23 // pred_fallthru
          _
        // Predicated region
        $region33: #{tpu_custom_call.1} parent=23 // pred_check
          %p109 = pneg %p48
        $region34: #{tpu_custom_call.1} parent=23 // pred_check_branch
          %111 = sbr.rel (%p109) target = $region36
        $region35: #{tpu_custom_call.1} parent=23 // pred_region
          %112 = dma.done [#allocation4], 128
        $region36: #{tpu_custom_call.1} parent=23 // pred_fallthru
          _
      $region24: #{tpu_custom_call.1} parent=5 // pred_fallthru
        _
      %p113 = scmp.le.s32.totalorder 2, %s9
      // Predicated region
      $region37: #{tpu_custom_call.1} parent=5 // pred_check
        %p114 = pneg %p113
      $region38: #{tpu_custom_call.1} parent=5 // pred_check_branch
        %116 = sbr.rel (%p114) target = $region40
      $region39: #{tpu_custom_call.1} parent=5 // pred_region
        %s117 = ssub.s32 %s9, 2
      $region40: #{tpu_custom_call.1} parent=5 // pred_fallthru
        _
    $region6: #{tpu_custom_call.1} parent=1 // loop_footer
      %s13 = sadd.s32 1, %s9
    $region7: #{tpu_custom_call.1} parent=1 // loop_footer_branch
      %8 = sbr.rel target = $region3
    $region8: #{tpu_custom_call.1} parent=1 // loop_exit
      _
    %118 = vsyncpa [#allocation3], 1
    %s119 = scalar_lea.sflag [#allocation3], 1
    %120 = vsyncpa %s119, 1
    %121 = vsyncpa [#allocation4], 1
    %s122 = scalar_lea.sflag [#allocation4], 1
    %123 = vsyncpa %s122, 1

// kernel: tpu_custom_call.1
$region0: #{tpu_custom_call.1}
  #allocation0 [shape = 'u32[]', space=smem, size = 0x4, offset = 0x4, fixed_abs, tag = 'smem constant byte address 0x4 - core index']
  #allocation1 [shape = 'u32[144,128]{1,0:T(1,128)}', space=vmem, size = 0x12000, scoped, tag = 'internal scratch']
  %s0 = inlined_call_operand.vmem [shape: f32[64,16], index: 0, kind: input, shape index: {}]
  %s1 = inlined_call_operand.vmem [shape: bf16[16,512], index: 1, kind: input, shape index: {}]
  %s2 = inlined_call_operand.vmem [shape: f32[1,512], index: 2, kind: input, shape index: {}]
  %s3 = inlined_call_operand.hbm [shape: bf16[64,512], index: 3, kind: output, shape index: {}]
  %s4 = sld [smem:[#allocation0]]
  $region22: #{tpu_custom_call.1} parent=0
    _
  %s6 = ssub.s32 1, %s4
  %s7 = scalar_select 0, %s6, %s4
  $region1: #{tpu_custom_call.1} parent=0
    #allocation2 [shape = 'u8[65536]{0}', space=vmem, size = 0x10000, scoped, tag = 'output window, operand 0, single buffered']
    #allocation3 [shape = 's32[1]{0}', space=sflag, size = 0x4, scoped, tag = 'scoped memory for tpu_custom_call.1']
    %8 = vsyncpa [#allocation3], 0
    // Predicated region
    $region2: #{tpu_custom_call.1} parent=1 // pred_check
      _
    $region3: #{tpu_custom_call.1} parent=1 // pred_check_branch
      %10 = sbr.rel (0) target = $region5
    $region4: #{tpu_custom_call.1} parent=1 // pred_region
      _
    $region5: #{tpu_custom_call.1} parent=1 // pred_fallthru
      _
    // Predicated region
    $region6: #{tpu_custom_call.1} parent=1 // pred_check
      _
    $region7: #{tpu_custom_call.1} parent=1 // pred_check_branch
      %12 = sbr.rel (0) target = $region9
    $region8: #{tpu_custom_call.1} parent=1 // pred_region
      _
    $region9: #{tpu_custom_call.1} parent=1 // pred_fallthru
      _
    // Predicated region
    $region10: #{tpu_custom_call.1} parent=1 // pred_check
      _
    $region11: #{tpu_custom_call.1} parent=1 // pred_check_branch
      %14 = sbr.rel (0) target = $region13
    $region12: #{tpu_custom_call.1} parent=1 // pred_region
      _
    $region13: #{tpu_custom_call.1} parent=1 // pred_fallthru
      _
    %v16 = vld [vmem:[%s0] sm:$0xff]
    %v17 = vld [vmem:[%s0 + $0x8] sm:$0xff]
    %v18 = vld [vmem:[%s0 + $0x10] sm:$0xff]
    %v19 = vld [vmem:[%s0 + $0x18] sm:$0xff]
    %v20 = vld [vmem:[%s0 + $0x20] sm:$0xff]
    %v21 = vld [vmem:[%s0 + $0x28] sm:$0xff]
    %v22 = vld [vmem:[%s0 + $0x30] sm:$0xff]
    %v23 = vld [vmem:[%s0 + $0x38] sm:$0xff]
    %v24 = vpack.c.bf16 %v17, %v16
    %v25 = vpack.c.bf16 %v19, %v18
    %v26 = vpack.c.bf16 %v21, %v20
    %v27 = vpack.c.bf16 %v23, %v22
    %v28 = vld [vmem:[%s1] sm:$0xff]
    %v29 = vld [vmem:[%s1 + $0x8] sm:$0xff]
    %v30 = vld [vmem:[%s1 + $0x10] sm:$0xff]
    %v31 = vld [vmem:[%s1 + $0x18] sm:$0xff]
    %v32 = vld [vmem:[%s2] sm:$0xf]
    %v34 = vlaneseq
    %v35 = vshrl.u32 %v34, 7
    %v36 = vsub.s32 0, %v35
    %v37 = vrot.slane %v32, %v36
    %v38 = vlaneseq
    %v39 = vshrl.u32 %v38, 7
    %v40 = vsub.s32 1, %v39
    %v41 = vrot.slane %v32, %v40
    %v42 = vlaneseq
    %v43 = vshrl.u32 %v42, 7
    %v44 = vsub.s32 2, %v43
    %v45 = vrot.slane %v32, %v44
    %v46 = vlaneseq
    %v47 = vshrl.u32 %v46, 7
    %v48 = vsub.s32 3, %v47
    %v49 = vrot.slane %v32, %v48
    %v58 = vunpack.c.l.b16 %v28
    %v59 = vunpack.c.h.b16 %v28
    %v60 = vunpack.c.l.b16 %v29
    %v61 = vunpack.c.h.b16 %v29
    %v62 = vunpack.c.l.b16 %v30
    %v63 = vunpack.c.h.b16 %v30
    %v64 = vunpack.c.l.b16 %v31
    %v65 = vunpack.c.h.b16 %v31
    %v66 = vpack.c.b16 %v62, %v58
    %v67 = vpack.c.b16 %v63, %v59
    %v68 = vpack.c.b16 %v64, %v60
    %v69 = vpack.c.b16 %v65, %v61
    %vm74 = vcmask 130048
    %v76 = vsel %vm74, %v24, 0
    %v79 = vsel %vm74, %v25, 0
    %v82 = vsel %vm74, %v26, 0
    %v85 = vsel %vm74, %v27, 0
    %87 = vmatprep.subr.bf16.mxu0 %v67
    %88 = vmatpush1.bf16.msra.mxu0 %v66
    %89 = vmatprep.subr.bf16.mxu0 0
    %90 = vmatpush1.bf16.msra.mxu0 0
    %91 = vmatprep.subr.bf16.mxu0 0
    %92 = vmatpush1.bf16.msra.mxu0 0
    %93 = vmatprep.subr.bf16.mxu0 0
    %94 = vmatpush1.bf16.msra.mxu0 0
    %95 = vmatprep.subr.bf16.mxu0 0
    %96 = vmatpush1.bf16.msra.mxu0 0
    %97 = vmatprep.subr.bf16.mxu0 0
    %98 = vmatpush1.bf16.msra.mxu0 0
    %99 = vmatprep.subr.bf16.mxu0 0
    %100 = vmatpush1.bf16.msra.mxu0 0
    %101 = vmatprep.subr.bf16.mxu0 0
    %102 = vmatpush1.bf16.msra.mxu0 0
    %103 = vmatprep.subr.bf16.mxu0 0
    %104 = vmatpush1.bf16.msra.mxu0 0
    %105 = vmatprep.subr.bf16.mxu0 0
    %106 = vmatpush1.bf16.msra.mxu0 0
    %107 = vmatprep.subr.bf16.mxu0 0
    %108 = vmatpush1.bf16.msra.mxu0 0
    %109 = vmatprep.subr.bf16.mxu0 0
    %110 = vmatpush1.bf16.msra.mxu0 0
    %111 = vmatprep.subr.bf16.mxu0 0
    %112 = vmatpush1.bf16.msra.mxu0 0
    %113 = vmatprep.subr.bf16.mxu0 0
    %114 = vmatpush1.bf16.msra.mxu0 0
    %115 = vmatprep.subr.bf16.mxu0 0
    %116 = vmatpush1.bf16.msra.mxu0 0
    %117 = vmatprep.subr.bf16.mxu0 0
    %118 = vmatpush1.bf16.msra.mxu0 0
    %119 = vmatprep.mubr.bf16.mxu0 0
    %120 = vmatmul.mubr.bf16.gmra.mrb[0].mxu0 %v76
    %v121 = vpop.f32.mrb[0].mxu0
    %v122 = vadd.f32 %v37, %v121
    %v123 = vpop.f32.mrb[0].mxu0
    %v124 = vadd.f32 %v41, %v123
    %v125 = vpop.f32.mrb[0].mxu0
    %v126 = vadd.f32 %v37, %v125
    %v127 = vpop.f32.mrb[0].mxu0
    %v128 = vadd.f32 %v41, %v127
    %129 = vmatprep.mubr.bf16.mxu0 0
    %130 = vmatmul.mubr.bf16.gmra.mrb[0].mxu0 %v79
    %v131 = vpop.f32.mrb[0].mxu0
    %v132 = vadd.f32 %v37, %v131
    %v133 = vpop.f32.mrb[0].mxu0
    %v134 = vadd.f32 %v41, %v133
    %v135 = vpop.f32.mrb[0].mxu0
    %v136 = vadd.f32 %v37, %v135
    %v137 = vpop.f32.mrb[0].mxu0
    %v138 = vadd.f32 %v41, %v137
    %139 = vmatprep.mubr.bf16.mxu0 0
    %140 = vmatmul.mubr.bf16.gmra.mrb[0].mxu0 %v82
    %v141 = vpop.f32.mrb[0].mxu0
    %v142 = vadd.f32 %v37, %v141
    %v143 = vpop.f32.mrb[0].mxu0
    %v144 = vadd.f32 %v41, %v143
    %v145 = vpop.f32.mrb[0].mxu0
    %v146 = vadd.f32 %v37, %v145
    %v147 = vpop.f32.mrb[0].mxu0
    %v148 = vadd.f32 %v41, %v147
    %149 = vmatprep.mubr.bf16.mxu0 0
    %150 = vmatmul.mubr.bf16.gmra.mrb[0].mxu0 %v85
    %v151 = vpop.f32.mrb[0].mxu0
    %v152 = vadd.f32 %v37, %v151
    %v153 = vpop.f32.mrb[0].mxu0
    %v154 = vadd.f32 %v41, %v153
    %v155 = vpop.f32.mrb[0].mxu0
    %v156 = vadd.f32 %v37, %v155
    %v157 = vpop.f32.mrb[0].mxu0
    %v158 = vadd.f32 %v41, %v157
    %159 = vdwg.mxu0
    %160 = vmatprep.subr.bf16.mxu0 %v69
    %161 = vmatpush1.bf16.msra.mxu0 %v68
    %162 = vmatprep.subr.bf16.mxu0 0
    %163 = vmatpush1.bf16.msra.mxu0 0
    %164 = vmatprep.subr.bf16.mxu0 0
    %165 = vmatpush1.bf16.msra.mxu0 0
    %166 = vmatprep.subr.bf16.mxu0 0
    %167 = vmatpush1.bf16.msra.mxu0 0
    %168 = vmatprep.subr.bf16.mxu0 0
    %169 = vmatpush1.bf16.msra.mxu0 0
    %170 = vmatprep.subr.bf16.mxu0 0
    %171 = vmatpush1.bf16.msra.mxu0 0
    %172 = vmatprep.subr.bf16.mxu0 0
    %173 = vmatpush1.bf16.msra.mxu0 0
    %174 = vmatprep.subr.bf16.mxu0 0
    %175 = vmatpush1.bf16.msra.mxu0 0
    %176 = vmatprep.subr.bf16.mxu0 0
    %177 = vmatpush1.bf16.msra.mxu0 0
    %178 = vmatprep.subr.bf16.mxu0 0
    %179 = vmatpush1.bf16.msra.mxu0 0
    %180 = vmatprep.subr.bf16.mxu0 0
    %181 = vmatpush1.bf16.msra.mxu0 0
    %182 = vmatprep.subr.bf16.mxu0 0
    %183 = vmatpush1.bf16.msra.mxu0 0
    %184 = vmatprep.subr.bf16.mxu0 0
    %185 = vmatpush1.bf16.msra.mxu0 0
    %186 = vmatprep.subr.bf16.mxu0 0
    %187 = vmatpush1.bf16.msra.mxu0 0
    %188 = vmatprep.subr.bf16.mxu0 0
    %189 = vmatpush1.bf16.msra.mxu0 0
    %190 = vmatprep.subr.bf16.mxu0 0
    %191 = vmatpush1.bf16.msra.mxu0 0
    %192 = vmatprep.mubr.bf16.mxu0 0
    %193 = vmatmul.mubr.bf16.gmra.mrb[0].mxu0 %v76
    %v194 = vpop.f32.mrb[0].mxu0
    %v195 = vadd.f32 %v45, %v194
    %v196 = vpop.f32.mrb[0].mxu0
    %v197 = vadd.f32 %v49, %v196
    %v198 = vpop.f32.mrb[0].mxu0
    %v199 = vadd.f32 %v45, %v198
    %v200 = vpop.f32.mrb[0].mxu0
    %v201 = vadd.f32 %v49, %v200
    %202 = vmatprep.mubr.bf16.mxu0 0
    %203 = vmatmul.mubr.bf16.gmra.mrb[0].mxu0 %v79
    %v204 = vpop.f32.mrb[0].mxu0
    %v205 = vadd.f32 %v45, %v204
    %v206 = vpop.f32.mrb[0].mxu0
    %v207 = vadd.f32 %v49, %v206
    %v208 = vpop.f32.mrb[0].mxu0
    %v209 = vadd.f32 %v45, %v208
    %v210 = vpop.f32.mrb[0].mxu0
    %v211 = vadd.f32 %v49, %v210
    %212 = vmatprep.mubr.bf16.mxu0 0
    %213 = vmatmul.mubr.bf16.gmra.mrb[0].mxu0 %v82
    %v214 = vpop.f32.mrb[0].mxu0
    %v215 = vadd.f32 %v45, %v214
    %v216 = vpop.f32.mrb[0].mxu0
    %v217 = vadd.f32 %v49, %v216
    %v218 = vpop.f32.mrb[0].mxu0
    %v219 = vadd.f32 %v45, %v218
    %v220 = vpop.f32.mrb[0].mxu0
    %v221 = vadd.f32 %v49, %v220
    %222 = vmatprep.mubr.bf16.mxu0 0
    %223 = vmatmul.mubr.bf16.gmra.mrb[0].mxu0 %v85
    %v224 = vpop.f32.mrb[0].mxu0
    %v225 = vadd.f32 %v45, %v224
    %v226 = vpop.f32.mrb[0].mxu0
    %v227 = vadd.f32 %v49, %v226
    %v228 = vpop.f32.mrb[0].mxu0
    %v229 = vadd.f32 %v45, %v228
    %v230 = vpop.f32.mrb[0].mxu0
    %v231 = vadd.f32 %v49, %v230
    %232 = vdwg.mxu0
    %v233 = vpack.c.bf16 %v126, %v122
    %v234 = vpack.c.bf16 %v128, %v124
    %v235 = vpack.c.bf16 %v199, %v195
    %v236 = vpack.c.bf16 %v201, %v197
    %v237 = vpack.c.bf16 %v136, %v132
    %v238 = vpack.c.bf16 %v138, %v134
    %v239 = vpack.c.bf16 %v209, %v205
    %v240 = vpack.c.bf16 %v211, %v207
    %v241 = vpack.c.bf16 %v146, %v142
    %v242 = vpack.c.bf16 %v148, %v144
    %v243 = vpack.c.bf16 %v219, %v215
    %v244 = vpack.c.bf16 %v221, %v217
    %v245 = vpack.c.bf16 %v156, %v152
    %v246 = vpack.c.bf16 %v158, %v154
    %v247 = vpack.c.bf16 %v229, %v225
    %v248 = vpack.c.bf16 %v231, %v227
    %v265 = vunpack.c.l.b16 %v233
    %v266 = vunpack.c.l.b16 %v234
    %v267 = vunpack.c.l.b16 %v235
    %v268 = vunpack.c.l.b16 %v236
    %v269 = vunpack.c.h.b16 %v233
    %v270 = vunpack.c.h.b16 %v234
    %v271 = vunpack.c.h.b16 %v235
    %v272 = vunpack.c.h.b16 %v236
    %v273 = vunpack.c.l.b16 %v237
    %v274 = vunpack.c.l.b16 %v238
    %v275 = vunpack.c.l.b16 %v239
    %v276 = vunpack.c.l.b16 %v240
    %v277 = vunpack.c.h.b16 %v237
    %v278 = vunpack.c.h.b16 %v238
    %v279 = vunpack.c.h.b16 %v239
    %v280 = vunpack.c.h.b16 %v240
    %v281 = vunpack.c.l.b16 %v241
    %v282 = vunpack.c.l.b16 %v242
    %v283 = vunpack.c.l.b16 %v243
    %v284 = vunpack.c.l.b16 %v244
    %v285 = vunpack.c.h.b16 %v241
    %v286 = vunpack.c.h.b16 %v242
    %v287 = vunpack.c.h.b16 %v243
    %v288 = vunpack.c.h.b16 %v244
    %v289 = vunpack.c.l.b16 %v245
    %v290 = vunpack.c.l.b16 %v246
    %v291 = vunpack.c.l.b16 %v247
    %v292 = vunpack.c.l.b16 %v248
    %v293 = vunpack.c.h.b16 %v245
    %v294 = vunpack.c.h.b16 %v246
    %v295 = vunpack.c.h.b16 %v247
    %v296 = vunpack.c.h.b16 %v248
    %v297 = vpack.c.b16 %v266, %v265
    %v298 = vpack.c.b16 %v268, %v267
    %v299 = vpack.c.b16 %v270, %v269
    %v300 = vpack.c.b16 %v272, %v271
    %v301 = vpack.c.b16 %v274, %v273
    %v302 = vpack.c.b16 %v276, %v275
    %v303 = vpack.c.b16 %v278, %v277
    %v304 = vpack.c.b16 %v280, %v279
    %v305 = vpack.c.b16 %v282, %v281
    %v306 = vpack.c.b16 %v284, %v283
    %v307 = vpack.c.b16 %v286, %v285
    %v308 = vpack.c.b16 %v288, %v287
    %v309 = vpack.c.b16 %v290, %v289
    %v310 = vpack.c.b16 %v292, %v291
    %v311 = vpack.c.b16 %v294, %v293
    %v312 = vpack.c.b16 %v296, %v295
    %329 = vst [vmem:[#allocation2] sm:$0xff] %v297
    %330 = vst [vmem:[#allocation2 + $0x8] sm:$0xff] %v298
    %331 = vst [vmem:[#allocation2 + $0x10] sm:$0xff] %v299
    %332 = vst [vmem:[#allocation2 + $0x18] sm:$0xff] %v300
    %333 = vst [vmem:[#allocation2 + $0x20] sm:$0xff] %v301
    %334 = vst [vmem:[#allocation2 + $0x28] sm:$0xff] %v302
    %335 = vst [vmem:[#allocation2 + $0x30] sm:$0xff] %v303
    %336 = vst [vmem:[#allocation2 + $0x38] sm:$0xff] %v304
    %337 = vst [vmem:[#allocation2 + $0x40] sm:$0xff] %v305
    %338 = vst [vmem:[#allocation2 + $0x48] sm:$0xff] %v306
    %339 = vst [vmem:[#allocation2 + $0x50] sm:$0xff] %v307
    %340 = vst [vmem:[#allocation2 + $0x58] sm:$0xff] %v308
    %341 = vst [vmem:[#allocation2 + $0x60] sm:$0xff] %v309
    %342 = vst [vmem:[#allocation2 + $0x68] sm:$0xff] %v310
    %343 = vst [vmem:[#allocation2 + $0x70] sm:$0xff] %v311
    %344 = vst [vmem:[#allocation2 + $0x78] sm:$0xff] %v312
    // Predicated region
    $region14: #{tpu_custom_call.1} parent=1 // pred_check
      _
    $region15: #{tpu_custom_call.1} parent=1 // pred_check_branch
      %346 = sbr.rel (0) target = $region17
    $region16: #{tpu_custom_call.1} parent=1 // pred_region
      %s348 = ssub.s32 2048, 2048
      %349 = vsyncadd [#allocation3], %s348
      %s350 = sshll.u32 [#allocation2], 4
      %s351 = int_to_ptr.vmem [resolvable:$true] %s350
      %356 = dma.vmem_to_hbm [thread:$0]  %s351, 2048, %s3, [#allocation3], 256, 256, 16
    $region17: #{tpu_custom_call.1} parent=1 // pred_fallthru
      _
    // Predicated region
    $region18: #{tpu_custom_call.1} parent=1 // pred_check
      _
    $region19: #{tpu_custom_call.1} parent=1 // pred_check_branch
      %358 = sbr.rel (0) target = $region21
    $region20: #{tpu_custom_call.1} parent=1 // pred_region
      %359 = dma.done [#allocation3], 2048
    $region21: #{tpu_custom_call.1} parent=1 // pred_fallthru
      _
    %360 = vsyncpa [#allocation3], 1

</llo_original>
